<compile_context>
chip_gen: v6e
topology: v6e:2x2x1
jax: 0.10.0
libtpu: 0.0.40
codegen_flags: <defaults>
</compile_context>

<pallas_src>
import functools
import math

import jax
import jax.numpy as jnp
from jax.experimental import pallas as pl
from jax.experimental.pallas import tpu as pltpu

_TARGET_TILE_BYTES = 2 * 1024 * 1024  # ~2 MiB f32 tiles; in+out double-buffered ~ 8 MiB VMEM


# --------------------------------------------------------------------------
# trace-time probe: resolve pltpu.roll's rotation direction once per process
# --------------------------------------------------------------------------
@functools.lru_cache(maxsize=None)
def _roll_plus_one_is_previous() -> bool:
    """True iff pltpu.roll(x, +1, axis)[j] == x[j-1] (np.roll convention).

    Resolving this once (tiny cached 8x128 kernel) lets the pair-partner
    selection in 'modulus'/'halfplane' use a plain integer lane-parity mask
    with exactly two XLU rolls.
    """
    def probe(o_ref):
        lanes = jax.lax.broadcasted_iota(jnp.int32, o_ref.shape, 1)
        o_ref[...] = pltpu.roll(lanes.astype(jnp.float32), 1, 1)

    out = pl.pallas_call(
        probe, out_shape=jax.ShapeDtypeStruct((8, 128), jnp.float32))()
    return int(jax.device_get(out)[0, 0]) == 127


# --------------------------------------------------------------------------
# kernel bodies (elementwise VPU/XLU/EUP work on interleaved VMEM tiles)
# --------------------------------------------------------------------------
def _make_kernel(mode: str, negative_slope: float, roll_plus_is_prev: bool = True):
    ns = float(negative_slope)

    def _is_real_lane(shape):
        # Integer lane-parity mask: even lanes hold Re, odd lanes hold Im.
        lanes = jax.lax.broadcasted_iota(jnp.int32, shape, len(shape) - 1)
        return jnp.bitwise_and(lanes, 1) == 0

    def _partner(x, is_real):
        # Other member of each interleaved (re, im) lane pair: two XLU rolls
        # + one select.  Lane width is always even, so pairs never straddle a
        # row and the parity mask is exact.
        axis = x.ndim - 1
        n = x.shape[axis]
        if roll_plus_is_prev:            # np.roll convention
            prv = pltpu.roll(x, 1, axis)          # prv[j] = x[j-1]
            nxt = pltpu.roll(x, n - 1, axis)      # nxt[j] = x[j+1]
        else:
            nxt = pltpu.roll(x, 1, axis)
            prv = pltpu.roll(x, n - 1, axis)
        return jnp.where(is_real, nxt, prv)

    if mode == "cartesian":
        # LeakyReLU on both planes == LeakyReLU on every interleaved lane.
        def kernel(x_ref, o_ref):
            x = x_ref[...]
            o_ref[...] = jnp.where(x < 0.0, ns * x, x)

    elif mode == "real":
        # LeakyReLU on the real lanes only; imaginary lanes pass through.
        def kernel(x_ref, o_ref):
            x = x_ref[...]
            is_real = _is_real_lane(x.shape)
            o_ref[...] = jnp.where(jnp.logical_and(is_real, x < 0.0), ns * x, x)

    elif mode == "modulus":
        # out = (|z| + b)/|z| * z  where |z| + b > 0 (and |z| > 0), else 0.
        # Reformulated as scale = 1 + b * rsqrt(|z|^2) (rsqrt on the EUP slot).
        # NOTE: intentionally returns 0 (not NaN) at |z| == 0, unlike the raw
        # PyTorch formula which produces 0/0 there.
        def kernel(bias_ref, x_ref, o_ref):
            b = bias_ref[0]
            x = x_ref[...]
            is_real = _is_real_lane(x.shape)
            p = _partner(x, is_real)
            sq = x * x + p * p                     # |z|^2, same on both lanes
            scale = 1.0 + b * jax.lax.rsqrt(sq)    # (|z|+b)/|z|
            keep = jnp.logical_and(scale > 0.0, sq > 0.0)
            o_ref[...] = jnp.where(keep, scale * x, 0.0)

    elif mode == "halfplane":
        # keep z where 0 <= angle(z) - b < pi/2, else negative_slope * z.
        # First-quadrant test on z * exp(-i*b); cos(b)/sin(b) precomputed.
        # TODO(synk): no angle-unwrapping for biases large enough to wrap the
        # principal branch (the module's default bias is well inside range).
        def kernel(rot_ref, x_ref, o_ref):
            cb = rot_ref[0]
            sb = rot_ref[1]
            x = x_ref[...]
            is_real = _is_real_lane(x.shape)
            p = _partner(x, is_real)
            zr = jnp.where(is_real, x, p)
            zi = jnp.where(is_real, p, x)
            wr = zr * cb + zi * sb                 # Re(z * e^{-ib})
            wi = zi * cb - zr * sb                 # Im(z * e^{-ib})
            cond = jnp.logical_and(wr > 0.0, wi >= 0.0)
            o_ref[...] = jnp.where(cond, x, ns * x)

    else:
        raise NotImplementedError(mode)

    return kernel


# --------------------------------------------------------------------------
# layout / tiling choices
# --------------------------------------------------------------------------
def _pick_layout(total: int):
    """(rows, lane, pad_floats) for a lane-dense view of `total` f32 elements."""
    # Preferred: lane-dense flat slab, no padding, enough rows to split.
    for lane in (1024, 512, 256, 128):
        if total % lane == 0 and total // lane >= 16:
            return total // lane, lane, 0
    for lane in (1024, 512, 256, 128):
        if total % lane == 0:
            return total // lane, lane, 0
    # Ragged total (rare): pad the tail up to the next 128-float boundary.
    # The (<128-float) pad is emitted inside the interleave expression and
    # the un-pad slice inside the recombine expression, so both fuse into the
    # existing boundary passes (no whole-array copy pass).
    pad = (-total) % 128
    return (total + pad) // 128, 128, pad


def _pick_row_block(rows: int, lane: int) -> int:
    """Rows per block: ~2 MiB tiles, 8-aligned, near-equal (even) block count
    so the 'parallel' grid axis splits evenly across v7x's two TensorCores."""
    if rows < 16:
        return rows                                   # single full-extent block
    max_rows = max(8, (_TARGET_TILE_BYTES // (4 * lane)) // 8 * 8)
    num_blocks = max(2, pl.cdiv(rows, max_rows))
    num_blocks += num_blocks % 2                      # even block count
    rb = ((pl.cdiv(rows, num_blocks) + 7) // 8) * 8   # 8-aligned block rows
    return min(rb, rows)


# --------------------------------------------------------------------------
# wrapper
# --------------------------------------------------------------------------
def complex_relu(z, mode="real", negative_slope=0.0, bias=None):
    """Pallas TPU implementation of ComplexReLU.forward.

    z    : complex array of any shape (computed as complex64).
    bias : float32 array of shape (1,) for 'modulus'/'halfplane' (the module's
           nn.Parameter `scale * ones(1)`).
    """
    # TODO(synk): non-scalar bias_shape broadcasting not implemented (the
    # module default bias_shape=None is a scalar, which is what we support).
    if z.dtype != jnp.complex64:
        z = z.astype(jnp.complex64)
    if z.size == 0:
        return z
    orig_shape = z.shape

    total = 2 * int(z.size)
    rows, lane, pad = _pick_layout(total)

    # complex64 -> interleaved float32 (rows, lane): ONE fused read+write pass
    # (the interleaved stream is byte-identical to the complex buffer).
    # TODO(synk): lax.bitcast_convert_type rejects complex dtypes and Pallas
    # TPU refs cannot be complex64, so this pass (and the recombine pass
    # below) is the structural floor for complex I/O around a real-dtype
    # Pallas kernel.
    flat = jnp.stack([jnp.real(z), jnp.imag(z)], axis=-1).reshape(-1)
    if pad:
        flat = jnp.pad(flat, (0, pad))      # <128 floats; fuses with the stack
    x2d = flat.reshape(rows, lane)

    rb = _pick_row_block(rows, lane)
    grid = (pl.cdiv(rows, rb),)
    tile = pl.BlockSpec((rb, lane), lambda i, *_: (i, 0))

    needs_scalar = mode in ("modulus", "halfplane")
    roll_prev = _roll_plus_one_is_previous() if needs_scalar else True
    kernel = _make_kernel(mode, negative_slope, roll_prev)

    scalar = None
    if needs_scalar:
        if bias is None:
            bias = jnp.ones((1,), jnp.float32)
        b = jnp.asarray(bias, jnp.float32).reshape(-1)[0]
        if mode == "modulus":
            scalar = jnp.reshape(b, (1,))
        else:  # halfplane: pass cos(b), sin(b) for the rotation test
            scalar = jnp.stack([jnp.cos(b), jnp.sin(b)]).astype(jnp.float32)

    grid_spec = pltpu.PrefetchScalarGridSpec(
        num_scalar_prefetch=1 if needs_scalar else 0,
        grid=grid,
        in_specs=[tile],
        out_specs=tile,
    )
    f = pl.pallas_call(
        kernel,
        out_shape=jax.ShapeDtypeStruct((rows, lane), jnp.float32),
        grid_spec=grid_spec,
        compiler_params=pltpu.CompilerParams(
            dimension_semantics=("parallel",)),
    )
    out2d = f(scalar, x2d) if needs_scalar else f(x2d)

    # interleaved float32 -> complex64: ONE fused read+write pass (the slice
    # for ragged totals fuses into this same pass).
    out_flat = out2d.reshape(-1)
    if pad:
        out_flat = out_flat[:total]
    pairs = out_flat.reshape(orig_shape + (2,))
    return jax.lax.complex(pairs[..., 0], pairs[..., 1])


# --------------------------------------------------------------------------
# Pure-JAX reference (mirrors the PyTorch forward) for verification.
# --------------------------------------------------------------------------
def _leaky(x, ns):
    return jnp.where(x >= 0.0, x, ns * x)


def _reference(z, mode, ns, bias):
    zr, zi = jnp.real(z), jnp.imag(z)
    if mode == "cartesian":
        return jax.lax.complex(_leaky(zr, ns), _leaky(zi, ns))
    if mode == "real":
        return jax.lax.complex(_leaky(zr, ns), zi)
    if mode == "modulus":
        zabs = jnp.sqrt(zr * zr + zi * zi)
        t = zabs + bias[0]
        return jnp.where(t > 0.0, (t * z) / zabs, 0.0 + 0.0j)
    if mode == "halfplane":
        ang = jnp.angle(z) - bias[0]
        cond = jnp.logical_and(ang >= 0.0, ang < math.pi / 2.0)
        return jnp.where(cond, z, ns * z)
    raise NotImplementedError(mode)


def _mismatch_fraction(a, b, tol=1e-4):
    return float(jnp.mean((jnp.abs(a - b) > tol).astype(jnp.float32)))


if __name__ == "__main__":
    key = jax.random.PRNGKey(0)

    # Deterministic parameter init (as in __init__: bias = scale * ones(1)).
    scale = 1.0
    bias = scale * jnp.ones((1,), jnp.float32)
    negative_slope = 0.1

    # (2,4,16,16): 256-lane slab, 2 balanced row blocks (2-TC parallel split)
    # (2,3,24,20): 128-lane slab, 45 rows -> balanced blocks + ragged edge block
    # (3,5,7):     ragged total -> tail-pad path (pad fused into boundary passes)
    shapes = [(2, 4, 16, 16), (2, 3, 24, 20), (3, 5, 7)]
    for shape in shapes:
        key, kr, ki = jax.random.split(key, 3)
        zr = jax.random.normal(kr, shape, jnp.float32)
        zi = jax.random.normal(ki, shape, jnp.float32)
        z = jax.lax.complex(zr, zi)

        for mode in ("real", "cartesian", "modulus", "halfplane"):
            out = complex_relu(z, mode=mode, negative_slope=negative_slope,
                               bias=bias)
            out = jax.block_until_ready(out)
            ref = _reference(z, mode, negative_slope, bias)
            frac = _mismatch_fraction(out, ref)
            # halfplane may differ only on (measure-zero) angular boundaries.
            limit = 1e-2 if mode == "halfplane" else 0.0
            assert frac <= limit, (
                f"shape={shape} mode={mode} mismatch fraction={frac}")
            assert out.shape == z.shape and out.dtype == z.dtype

    print("KERNEL_OK")
</pallas_src>

<mosaic_0001>
module attributes {stable_mosaic.version = 11 : i64} {
  func.func @kernel(%arg0: i32, %arg1: memref<8x256xf32, #tpu.memory_space<vmem>>, %arg2: memref<8x256xf32, #tpu.memory_space<vmem>>) attributes {dimension_semantics = [#tpu.dimension_semantics<parallel>], iteration_bounds = array<i64: 2>, scalar_prefetch = 0 : i64, scratch_operands = 0 : i64, tpu.core_type = #tpu.core_type<tc>, window_params = [{transform_indices = @transform_0, window_bounds = array<i64: 8, 256>}, {transform_indices = @transform_1, window_bounds = array<i64: 8, 256>}]} {
    %c0 = arith.constant 0 : index
    %c0_0 = arith.constant 0 : index
    %0 = vector.load %arg1[%c0, %c0_0] : memref<8x256xf32, #tpu.memory_space<vmem>>, vector<8x256xf32>
    %1 = tpu.iota {dimensions = array<i32: 1>} : vector<8x256xi32>
    %c1_i32 = arith.constant 1 : i32
    %2 = vector.broadcast %c1_i32 : i32 to vector<8x256xi32>
    %3 = arith.andi %1, %2 : vector<8x256xi32>
    %c0_i32 = arith.constant 0 : i32
    %4 = vector.broadcast %c0_i32 : i32 to vector<8x256xi32>
    %5 = arith.cmpi eq, %3, %4 : vector<8x256xi32>
    %cst = arith.constant 0.000000e+00 : f32
    %6 = vector.broadcast %cst : f32 to vector<8x256xf32>
    %7 = arith.cmpf olt, %0, %6 : vector<8x256xf32>
    %8 = arith.andi %5, %7 : vector<8x256xi1>
    %cst_1 = arith.constant 1.000000e-01 : f32
    %9 = vector.broadcast %cst_1 : f32 to vector<8x256xf32>
    %10 = arith.mulf %9, %0 : vector<8x256xf32>
    %11 = arith.select %8, %10, %0 : vector<8x256xi1>, vector<8x256xf32>
    %c0_2 = arith.constant 0 : index
    %c0_3 = arith.constant 0 : index
    %12 = vector.load %arg2[%c0_2, %c0_3] : memref<8x256xf32, #tpu.memory_space<vmem>>, vector<8x256xf32>
    tpu.vector_store %arg2[%c0_2, %c0_3], %11 {strides = array<i32>} : memref<8x256xf32, #tpu.memory_space<vmem>>, vector<8x256xf32>,
    return
  }
  func.func @transform_0(%arg0: i32) -> (i32, i32) {
    %c0_i32 = arith.constant 0 : i32
    %c0_i32_0 = arith.constant 0 : i32
    return %arg0, %c0_i32 : i32, i32
  }
  func.func @transform_1(%arg0: i32) -> (i32, i32) {
    %c0_i32 = arith.constant 0 : i32
    %c0_i32_0 = arith.constant 0 : i32
    return %arg0, %c0_i32 : i32, i32
  }
}

</mosaic_0001>

<llo_original>
// kernel: tpu_custom_call.1
$region0: #{tpu_custom_call.1}
  #allocation0 [shape = 'u32[]', space=smem, size = 0x4, offset = 0x4, fixed_abs, tag = 'smem constant byte address 0x4 - core index']
  #allocation1 [shape = 'u32[144,128]{1,0:T(1,128)}', space=vmem, size = 0x12000, scoped, tag = 'internal scratch']
  %s0 = inlined_call_operand.hbm [shape: f32[16,256], index: 0, kind: input, shape index: {}]
  %s1 = inlined_call_operand.hbm [shape: f32[16,256], index: 1, kind: output, shape index: {}]
  %s2 = sld [smem:[#allocation0]]
  $region41: #{tpu_custom_call.1} parent=0
    _
  %s4 = ssub.s32 1, %s2
  %s5 = scalar_select 0, %s4, %s2
  $region1: #{tpu_custom_call.1} parent=0
    #allocation2 [shape = 'u8[16384]{0}', space=vmem, size = 0x4000, scoped, tag = 'input window, operand 0']
    #allocation3 [shape = 's32[2]{0}', space=sflag, size = 0x8, scoped, tag = 'scoped memory for tpu_custom_call.1']
    #allocation4 [shape = 's32[2]{0}', space=sflag, size = 0x8, scoped, tag = 'scoped memory for tpu_custom_call.1']
    #allocation5 [shape = 'u8[16384]{0}', space=vmem, size = 0x4000, scoped, tag = 'output window, operand 0']
    %6 = vsyncpa [#allocation3], 0
    %s7 = scalar_lea.sflag [#allocation3], 1
    %8 = vsyncpa %s7, 0
    %9 = vsyncpa [#allocation4], 0
    %s10 = scalar_lea.sflag [#allocation4], 1
    %11 = vsyncpa %s10, 0
    loop: start=0, step=1, limit=4
    $region2: #{tpu_custom_call.1} parent=1 // loop_pre_header
      _
    $region3: #{tpu_custom_call.1} parent=1 // loop_header
      %s13 = sphi 0, %s17
      %p14 = scmp.ge.s32.totalorder %s13, 4
      %s23 = sphi 0, %s25
      %s26 = sphi 0, %s23
      %s27 = sphi 0, %s26
      %s43 = sphi 0, %s27
      %s49 = sphi 0, %s51
      %s52 = sphi 0, %s49
      %s53 = sphi 0, %s52
      %s69 = sphi 0, %s53
    $region4: #{tpu_custom_call.1} parent=1 // loop_header_branch
      %16 = sbr.rel (%p14) target = $region8
    $region5: #{tpu_custom_call.1} parent=1 // loop_body
      %s18 = ssub.s32 %s13, 1
      %s19 = ssub.s32 %s13, 2
      %s20 = sadd.s32 %s13, 1
      %s21 = ssub.s32 %s13, %s20
      %p22 = scmp.eq.s32.totalorder %s21, 0
      %s24 = sadd.s32 %s23, 1
      %s25 = scalar_select %p22, %s23, %s24
      %p28 = pneg %p22
      %p29 = scmp.eq.s32.totalorder %s13, 1
      %p30 = por %p28, %p29
      %p31 = scmp.ne.s32.totalorder %s23, %s26
      %p32 = scmp.eq.s32.totalorder %s13, 0
      %p33 = por %p31, %p32
      %p34 = scmp.ne.s32.totalorder %s23, %s26
      %p35 = scmp.eq.s32.totalorder %s18, 1
      %p36 = por %p34, %p35
      %p37 = scmp.ne.s32.totalorder %s26, %s27
      %p38 = scmp.eq.s32.totalorder %s18, 0
      %p39 = por %p37, %p38
      %p40 = scmp.ne.s32.totalorder %s26, %s27
      %p41 = scmp.eq.s32.totalorder %s19, 1
      %p42 = por %p40, %p41
      %p44 = scmp.ne.s32.totalorder %s27, %s43
      %p45 = scmp.eq.s32.totalorder %s19, 0
      %p46 = por %p44, %p45
      %s47 = ssub.s32 %s13, %s20
      %p48 = scmp.eq.s32.totalorder %s47, 0
      %s50 = sadd.s32 %s49, 1
      %s51 = scalar_select %p48, %s49, %s50
      %p54 = pneg %p48
      %p55 = scmp.eq.s32.totalorder %s13, 1
      %p56 = por %p54, %p55
      %p57 = scmp.ne.s32.totalorder %s49, %s52
      %p58 = scmp.eq.s32.totalorder %s13, 0
      %p59 = por %p57, %p58
      %p60 = scmp.ne.s32.totalorder %s49, %s52
      %p61 = scmp.eq.s32.totalorder %s18, 1
      %p62 = por %p60, %p61
      %p63 = scmp.ne.s32.totalorder %s52, %s53
      %p64 = scmp.eq.s32.totalorder %s18, 0
      %p65 = por %p63, %p64
      %p66 = scmp.ne.s32.totalorder %s52, %s53
      %p67 = scmp.eq.s32.totalorder %s19, 1
      %p68 = por %p66, %p67
      %p70 = scmp.ne.s32.totalorder %s53, %s69
      %p71 = scmp.eq.s32.totalorder %s19, 0
      %p72 = por %p70, %p71
      %p73 = scmp.le.s32.totalorder 1, %s13
      %p74 = scmp.lt.s32.totalorder %s13, 3
      %p75 = pnand %p73, %p74
      %p76 = pneg %p75
      // Predicated region
      $region9: #{tpu_custom_call.1} parent=5 // pred_check
        _
      $region10: #{tpu_custom_call.1} parent=5 // pred_check_branch
        %78 = sbr.rel (%p75) target = $region12
      $region11: #{tpu_custom_call.1} parent=5 // pred_region
        %s79 = ssub.s32 %s13, 1
      $region12: #{tpu_custom_call.1} parent=5 // pred_fallthru
        _
      %p80 = scmp.lt.s32.totalorder %s13, 2
      // Predicated region
      $region13: #{tpu_custom_call.1} parent=5 // pred_check
        %p81 = pneg %p80
      $region14: #{tpu_custom_call.1} parent=5 // pred_check_branch
        %83 = sbr.rel (%p81) target = $region16
      $region15: #{tpu_custom_call.1} parent=5 // pred_region
        // Predicated region
        $region17: #{tpu_custom_call.1} parent=15 // pred_check
          %p84 = pneg %p33
        $region18: #{tpu_custom_call.1} parent=15 // pred_check_branch
          %86 = sbr.rel (%p84) target = $region20
        $region19: #{tpu_custom_call.1} parent=15 // pred_region
          %s87 = sand.u32 %s23, 1
          %s88 = scalar_lea.sflag [#allocation3], %s87
          %s89 = sand.u32 %s23, 1
          %s90 = smul.addr %s89, 16
          %s91 = scalar_lea.vmem [#allocation2], %s90
          %s93 = ssub.s32 256, 256
          %94 = vsyncadd %s88, %s93
          %s95 = smul.addr %s13, 2
          %s96 = smul.addr %s95, 128
          %s97 = scalar_lea.hbm %s0, %s96
          %s99 = sshll.u32 %s91, 4
          %s100 = int_to_ptr.vmem [resolvable:$true] %s99
          %102 = dma.hbm_to_vmem [thread:$0]  %s97, 256, %s100, %s88
        $region20: #{tpu_custom_call.1} parent=15 // pred_fallthru
          _
      $region16: #{tpu_custom_call.1} parent=5 // pred_fallthru
        _
      %p103 = scmp.le.s32.totalorder 1, %s13
      %p104 = scmp.lt.s32.totalorder %s13, 3
      %p105 = pnand %p103, %p104
      %p106 = pneg %p105
      // Predicated region
      $region21: #{tpu_custom_call.1} parent=5 // pred_check
        _
      $region22: #{tpu_custom_call.1} parent=5 // pred_check_branch
        %108 = sbr.rel (%p105) target = $region24
      $region23: #{tpu_custom_call.1} parent=5 // pred_region
        %s109 = ssub.s32 %s13, 1
        %s110 = sand.u32 %s26, 1
        %s111 = scalar_lea.sflag [#allocation3], %s110
        %s112 = sand.u32 %s26, 1
        %s113 = smul.addr %s112, 16
        %s114 = scalar_lea.vmem [#allocation2], %s113
        // Predicated region
        $region25: #{tpu_custom_call.1} parent=23 // pred_check
          %p115 = pneg %p39
        $region26: #{tpu_custom_call.1} parent=23 // pred_check_branch
          %117 = sbr.rel (%p115) target = $region28
        $region27: #{tpu_custom_call.1} parent=23 // pred_region
          %118 = dma.done %s111, 256
        $region28: #{tpu_custom_call.1} parent=23 // pred_fallthru
          _
        %s119 = sand.u32 %s26, 1
        %s120 = scalar_lea.sflag [#allocation3], %s119
        %s121 = sand.u32 %s26, 1
        %s122 = smul.addr %s121, 16
        %s123 = scalar_lea.vmem [#allocation2], %s122
        %p124 = pneg %p39
        %p125 = pneg %p36
        %p126 = pneg %p65
        %p127 = pneg %p62
        %s128 = sand.u32 %s52, 1
        %s129 = scalar_lea.sflag [#allocation4], %s128
        %s130 = sand.u32 %s52, 1
        %s131 = smul.addr %s130, 16
        %s132 = scalar_lea.vmem [#allocation5], %s131
        %v133 = vld [vmem:[%s114] sm:$0xff]
        %v134 = vld [vmem:[%s114 + $0x8] sm:$0xff]
        %v135 = vlaneseq
        %v136 = vand.u32 %v135, 127
        %v137 = vadd.s32 %v136, 128
        %v138 = vand.u32 %v136, 1
        %v139 = vand.u32 %v137, 1
        %vm140 = vcmp.eq.s32.totalorder %v138, 0
        %vm141 = vcmp.eq.s32.totalorder %v139, 0
        %vm142 = vcmp.lt.f32.partialorder %v133, 0.0
        %vm143 = vcmp.lt.f32.partialorder %v134, 0.0
        %vm144 = vmand %vm140, %vm142
        %vm145 = vmand %vm141, %vm143
        %v146 = vmul.f32 %v133, 0.1
        %v147 = vmul.f32 %v134, 0.1
        %v148 = vsel %vm144, %v146, %v133
        %v149 = vsel %vm145, %v147, %v134
        %150 = vst [vmem:[%s132] sm:$0xff] %v148
        %151 = vst [vmem:[%s132 + $0x8] sm:$0xff] %v149
        %s152 = sand.u32 %s52, 1
        %s153 = scalar_lea.sflag [#allocation4], %s152
        %s154 = sand.u32 %s52, 1
        %s155 = smul.addr %s154, 16
        %s156 = scalar_lea.vmem [#allocation5], %s155
        // Predicated region
        $region29: #{tpu_custom_call.1} parent=23 // pred_check
          %p157 = pneg %p62
        $region30: #{tpu_custom_call.1} parent=23 // pred_check_branch
          %159 = sbr.rel (%p157) target = $region32
        $region31: #{tpu_custom_call.1} parent=23 // pred_region
          %s161 = ssub.s32 256, 256
          %162 = vsyncadd %s153, %s161
          %s163 = smul.addr %s18, 2
          %s164 = smul.addr %s163, 128
          %s165 = scalar_lea.hbm %s1, %s164
          %s167 = sshll.u32 %s156, 4
          %s168 = int_to_ptr.vmem [resolvable:$true] %s167
          %170 = dma.vmem_to_hbm [thread:$0]  %s168, 256, %s165, %s153
        $region32: #{tpu_custom_call.1} parent=23 // pred_fallthru
          _
      $region24: #{tpu_custom_call.1} parent=5 // pred_fallthru
        _
      %p171 = scmp.le.s32.totalorder 2, %s13
      // Predicated region
      $region33: #{tpu_custom_call.1} parent=5 // pred_check
        %p172 = pneg %p171
      $region34: #{tpu_custom_call.1} parent=5 // pred_check_branch
        %174 = sbr.rel (%p172) target = $region36
      $region35: #{tpu_custom_call.1} parent=5 // pred_region
        %s175 = ssub.s32 %s13, 2
        // Predicated region
        $region37: #{tpu_custom_call.1} parent=35 // pred_check
          %p176 = pneg %p68
        $region38: #{tpu_custom_call.1} parent=35 // pred_check_branch
          %178 = sbr.rel (%p176) target = $region40
        $region39: #{tpu_custom_call.1} parent=35 // pred_region
          %s179 = sand.u32 %s53, 1
          %s180 = scalar_lea.sflag [#allocation4], %s179
          %s181 = sand.u32 %s53, 1
          %s182 = smul.addr %s181, 16
          %s183 = scalar_lea.vmem [#allocation5], %s182
          %184 = dma.done %s180, 256
        $region40: #{tpu_custom_call.1} parent=35 // pred_fallthru
          _
      $region36: #{tpu_custom_call.1} parent=5 // pred_fallthru
        _
    $region6: #{tpu_custom_call.1} parent=1 // loop_footer
      %s17 = sadd.s32 1, %s13
    $region7: #{tpu_custom_call.1} parent=1 // loop_footer_branch
      %12 = sbr.rel target = $region3
    $region8: #{tpu_custom_call.1} parent=1 // loop_exit
      _
    %185 = vsyncpa [#allocation3], 1
    %s186 = scalar_lea.sflag [#allocation3], 1
    %187 = vsyncpa %s186, 1
    %188 = vsyncpa [#allocation4], 1
    %s189 = scalar_lea.sflag [#allocation4], 1
    %190 = vsyncpa %s189, 1

</llo_original>
